<compile_context>
chip_gen: v7x
topology: tpu7x:2x2x1
jax: 0.10.0
libtpu: 0.0.40
codegen_flags: <defaults>
</compile_context>

<pallas_src>
import functools
from typing import List, Sequence

import jax
import jax.numpy as jnp
from jax.experimental import pallas as pl
from jax.experimental.pallas import tpu as pltpu

LANE = 128            # hidden/output feature dims are padded to one lane width
MAX_ROW_TILE = 2048   # safe in VMEM on all of v5e / v6e / v7x
MIN_SPLIT_ROWS = 1024 # only split the tile when each half is still this big


def _round_up(x: int, m: int) -> int:
    return ((x + m - 1) // m) * m


def _choose_row_tile(rows: int) -> int:
    """Largest sublane-aligned tile <= MAX_ROW_TILE; split into >=2 grid steps
    only when each half is still a large tile (v7x dual-TC)."""
    rows8 = _round_up(max(rows, 1), 8)
    tile = min(MAX_ROW_TILE, rows8)
    if tile == rows8 and rows8 >= 2 * MIN_SPLIT_ROWS:
        tile = _round_up((rows8 + 1) // 2, 8)
    return tile


def _mlp_kernel(num_layers, out_dim, x_ref, w0_ref, b_ref, *refs):
    """Fused MLP over one row tile.

    x_ref : (row_tile, d)        input dtype (f32 or bf16)
    w0_ref: (d, 128)             bf16, out-dim zero-padded
    b_ref : (L, 1, 128)          f32, zero-padded biases
    refs  : (w_rest_ref, out_ref) if num_layers > 1 else (out_ref,)
            w_rest_ref: (L-1, 128, 128) bf16, zero-padded
            out_ref   : (row_tile, out_dim) f32
    """
    out_ref = refs[-1]
    # Layer 0: true-K matmul (K = d, no lane padding of x needed).
    h = jnp.dot(x_ref[...].astype(jnp.bfloat16), w0_ref[...],
                preferred_element_type=jnp.float32) + b_ref[0]
    if num_layers > 1:
        w_rest_ref = refs[0]
        for l in range(1, num_layers):
            h = jnp.maximum(h, 0.0)                       # ReLU (VPU, f32)
            h = jnp.dot(h.astype(jnp.bfloat16), w_rest_ref[l - 1],
                        preferred_element_type=jnp.float32) + b_ref[l]
    # Padded lanes carry zeros through every layer (zero weights/bias, and
    # relu(0) == 0), so slicing the real lanes is exact.
    out_ref[...] = h[:, :out_dim].astype(out_ref.dtype)


def fc_block_pallas(x, w0, w_rest, b_stack, out_dim):
    """Fused MLP forward.

    x:       (batch, d) or (batch, group, d), f32 or bf16
    w0:      (d, 128) bf16
    w_rest:  (L-1, 128, 128) bf16 or None
    b_stack: (L, 1, 128) f32
    """
    orig_shape = x.shape
    d = orig_shape[-1]
    if x.dtype not in (jnp.dtype(jnp.bfloat16), jnp.dtype(jnp.float32)):
        x = x.astype(jnp.float32)
    x2 = x.reshape(-1, d)                     # free reshape, no dtype change
    rows = x2.shape[0]
    num_layers = b_stack.shape[0]

    row_tile = _choose_row_tile(rows)
    grid = (pl.cdiv(rows, row_tile),)         # ragged last block is masked

    in_specs = [
        pl.BlockSpec((row_tile, d), lambda i: (i, 0)),
        # grid-invariant parameter blocks: constant block index => no re-DMA
        pl.BlockSpec(w0.shape, lambda i: (0, 0)),
        pl.BlockSpec(b_stack.shape, lambda i: (0, 0, 0)),
    ]
    operands = [x2, w0, b_stack]
    if w_rest is not None:
        in_specs.append(pl.BlockSpec(w_rest.shape, lambda i: (0, 0, 0)))
        operands.append(w_rest)

    out = pl.pallas_call(
        functools.partial(_mlp_kernel, num_layers, out_dim),
        out_shape=jax.ShapeDtypeStruct((rows, out_dim), jnp.float32),
        grid=grid,
        in_specs=in_specs,
        out_specs=pl.BlockSpec((row_tile, out_dim), lambda i: (i, 0)),
        compiler_params=pltpu.CompilerParams(
            dimension_semantics=("parallel",)),
    )(*operands)

    return out.reshape(*orig_shape[:-1], out_dim)


# jit so the (free) reshapes around the pallas_call stay in one XLA program.
_fc_block_jit = jax.jit(fc_block_pallas, static_argnums=(4,))


class FCBlock1Pallas:
    """JAX/Pallas port of PyTorch `_FCBlock1`."""

    def __init__(self, in_features: int, units: Sequence[int],
                 bias: bool = True, key: jax.Array = None):
        units = list(units)
        units = units + [1] if units[-1] != 1 else units
        in_feats: List[int] = [in_features] + units[:-1]

        # hidden/output dims map to one 128-lane tile per layer; the input
        # feature dim of the FIRST layer is unconstrained (true-K matmul).
        for f in units:
            if f > LANE:
                raise ValueError(
                    f"hidden/output dim {f} > {LANE} not supported by this "
                    f"single-lane-tile kernel")

        if key is None:
            key = jax.random.PRNGKey(0)

        self.weights: List[jax.Array] = []
        self.biases: List[jax.Array] = []
        pweights: List[jax.Array] = []
        pbiases: List[jax.Array] = []
        for li, (fin, fout) in enumerate(zip(in_feats, units)):
            key, kw, kb = jax.random.split(key, 3)
            bound = 1.0 / (fin ** 0.5)
            # PyTorch nn.Linear stores (out, in); we keep (in, out) so the
            # kernel computes x @ W.
            w = jax.random.uniform(kw, (fin, fout), jnp.float32, -bound, bound)
            if bias:
                b = jax.random.uniform(kb, (fout,), jnp.float32, -bound, bound)
            else:
                b = jnp.zeros((fout,), jnp.float32)
            self.weights.append(w)
            self.biases.append(b)

            if li == 0:
                wp = jnp.pad(w, ((0, 0), (0, LANE - fout)))          # (d, 128)
            else:
                wp = jnp.pad(w, ((0, LANE - fin), (0, LANE - fout))) # (128,128)
            pweights.append(wp.astype(jnp.bfloat16))
            pbiases.append(jnp.pad(b, (0, LANE - fout)).reshape(1, LANE))

        self.w0 = pweights[0]                                         # (d,128) bf16
        self.w_rest = (jnp.stack(pweights[1:])
                       if len(pweights) > 1 else None)                # (L-1,128,128)
        self.b_stack = jnp.stack(pbiases).astype(jnp.float32)         # (L,1,128)
        self.out_dim = units[-1]

    def __call__(self, x):
        return _fc_block_jit(x, self.w0, self.w_rest, self.b_stack,
                             self.out_dim)

    def reference(self, x):
        """Pure-JAX reference matching the kernel's bf16-operand / f32-acc
        matmuls (same numerics as the MXU path)."""
        h = x.astype(jnp.float32)
        n = len(self.weights)
        for i, (w, b) in enumerate(zip(self.weights, self.biases)):
            h = jnp.dot(h.astype(jnp.bfloat16), w.astype(jnp.bfloat16),
                        preferred_element_type=jnp.float32) + b
            if i != n - 1:
                h = jnp.maximum(h, 0.0)
        return h

    def reference_f32(self, x):
        """Full-f32 reference (matches the PyTorch module up to bf16 rounding
        of the MXU operands)."""
        h = x.astype(jnp.float32)
        n = len(self.weights)
        for i, (w, b) in enumerate(zip(self.weights, self.biases)):
            h = h @ w + b
            if i != n - 1:
                h = jnp.maximum(h, 0.0)
        return h


if __name__ == "__main__":
    key = jax.random.PRNGKey(0)
    k_x, k_params = jax.random.split(key)

    # (batch, group, d) path  — _FCBlock1(in_features=16, units=[32, 8, 7])
    batch, group, d = 2, 8, 16
    x = jax.random.normal(k_x, (batch, group, d), jnp.float32)
    model = FCBlock1Pallas(in_features=d, units=[32, 8, 7], bias=True,
                           key=k_params)
    out = jax.block_until_ready(model(x))
    assert out.shape == (batch, group, 1), out.shape
    ref = model.reference(x)
    assert jnp.allclose(out, ref, atol=1e-4, rtol=1e-4), float(
        jnp.max(jnp.abs(out - ref)))
    # bf16 operands stay close to the full-f32 math too
    ref32 = model.reference_f32(x)
    assert jnp.allclose(out, ref32, atol=5e-2, rtol=5e-2), float(
        jnp.max(jnp.abs(out - ref32)))

    # (batch, d) path, bias=False — docstring example _FCBlock1(16, [4,5,2,7])
    x2d = jax.random.normal(k_x, (10, d), jnp.float32)
    model2 = FCBlock1Pallas(in_features=d, units=[4, 5, 2, 7], bias=False,
                            key=k_params)
    out2 = jax.block_until_ready(model2(x2d))
    assert out2.shape == (10, 1), out2.shape
    assert jnp.allclose(out2, model2.reference(x2d), atol=1e-4, rtol=1e-4)

    # exercise the multi-step grid + ragged final block path (rows > row tile)
    xbig = jax.random.normal(k_x, (2500, d), jnp.float32)
    out3 = jax.block_until_ready(model(xbig))
    assert out3.shape == (2500, 1), out3.shape
    assert jnp.allclose(out3, model.reference(xbig), atol=1e-4, rtol=1e-4)

    print("KERNEL_OK")
</pallas_src>

<mosaic_0001>
module attributes {stable_mosaic.version = 11 : i64} {
  func.func @_mlp_kernel(%arg0: i32, %arg1: memref<16x16xf32, #tpu.memory_space<vmem>>, %arg2: memref<16x128xbf16, #tpu.memory_space<vmem>>, %arg3: memref<4x1x128xf32, #tpu.memory_space<vmem>>, %arg4: memref<3x128x128xbf16, #tpu.memory_space<vmem>>, %arg5: memref<16x1xf32, #tpu.memory_space<vmem>>) attributes {dimension_semantics = [#tpu.dimension_semantics<parallel>], iteration_bounds = array<i64: 1>, scalar_prefetch = 0 : i64, scratch_operands = 0 : i64, tpu.core_type = #tpu.core_type<tc>, window_params = [{transform_indices = @transform_0, window_bounds = array<i64: 16, 16>}, {pipeline_mode = #tpu.pipeline_mode<synchronous>, transform_indices = @transform_1, window_bounds = array<i64: 16, 128>}, {pipeline_mode = #tpu.pipeline_mode<synchronous>, transform_indices = @transform_2, window_bounds = array<i64: 4, 1, 128>}, {pipeline_mode = #tpu.pipeline_mode<synchronous>, transform_indices = @transform_3, window_bounds = array<i64: 3, 128, 128>}, {transform_indices = @transform_4, window_bounds = array<i64: 16, 1>}]} {
    %c0 = arith.constant 0 : index
    %c0_0 = arith.constant 0 : index
    %0 = vector.load %arg1[%c0, %c0_0] : memref<16x16xf32, #tpu.memory_space<vmem>>, vector<16x16xf32>
    %1 = arith.truncf %0 : vector<16x16xf32> to vector<16x16xbf16>
    %c0_1 = arith.constant 0 : index
    %c0_2 = arith.constant 0 : index
    %2 = vector.load %arg2[%c0_1, %c0_2] : memref<16x128xbf16, #tpu.memory_space<vmem>>, vector<16x128xbf16>
    %cst = arith.constant dense<0.000000e+00> : vector<16x128xf32>
    %3 = tpu.matmul %1, %2, %cst {dimension_numbers = #tpu.dot_dimension_numbers<[1], [0], [0], [1], [0, 0, 1, 1], [], []>} : vector<16x16xbf16>, vector<16x128xbf16>, vector<16x128xf32> -> vector<16x128xf32>
    %c0_3 = arith.constant 0 : index
    %c0_4 = arith.constant 0 : index
    %c0_5 = arith.constant 0 : index
    %4 = vector.load %arg3[%c0_3, %c0_4, %c0_5] : memref<4x1x128xf32, #tpu.memory_space<vmem>>, vector<1x1x128xf32>
    %5 = vector.shape_cast %4 : vector<1x1x128xf32> to vector<1x128xf32>
    %6 = vector.broadcast %5 : vector<1x128xf32> to vector<16x128xf32>
    %7 = arith.addf %3, %6 : vector<16x128xf32>
    %cst_6 = arith.constant 0.000000e+00 : f32
    %8 = vector.broadcast %cst_6 : f32 to vector<16x128xf32>
    %9 = arith.maximumf %7, %8 : vector<16x128xf32>
    %10 = arith.truncf %9 : vector<16x128xf32> to vector<16x128xbf16>
    %c0_7 = arith.constant 0 : index
    %c0_8 = arith.constant 0 : index
    %c0_9 = arith.constant 0 : index
    %11 = vector.load %arg4[%c0_7, %c0_8, %c0_9] : memref<3x128x128xbf16, #tpu.memory_space<vmem>>, vector<1x128x128xbf16>
    %12 = vector.shape_cast %11 : vector<1x128x128xbf16> to vector<128x128xbf16>
    %cst_10 = arith.constant dense<0.000000e+00> : vector<16x128xf32>
    %13 = tpu.matmul %10, %12, %cst_10 {dimension_numbers = #tpu.dot_dimension_numbers<[1], [0], [0], [1], [0, 0, 1, 1], [], []>} : vector<16x128xbf16>, vector<128x128xbf16>, vector<16x128xf32> -> vector<16x128xf32>
    %c1 = arith.constant 1 : index
    %c0_11 = arith.constant 0 : index
    %c0_12 = arith.constant 0 : index
    %14 = vector.load %arg3[%c1, %c0_11, %c0_12] : memref<4x1x128xf32, #tpu.memory_space<vmem>>, vector<1x1x128xf32>
    %15 = vector.shape_cast %14 : vector<1x1x128xf32> to vector<1x128xf32>
    %16 = vector.broadcast %15 : vector<1x128xf32> to vector<16x128xf32>
    %17 = arith.addf %13, %16 : vector<16x128xf32>
    %cst_13 = arith.constant 0.000000e+00 : f32
    %18 = vector.broadcast %cst_13 : f32 to vector<16x128xf32>
    %19 = arith.maximumf %17, %18 : vector<16x128xf32>
    %20 = arith.truncf %19 : vector<16x128xf32> to vector<16x128xbf16>
    %c1_14 = arith.constant 1 : index
    %c0_15 = arith.constant 0 : index
    %c0_16 = arith.constant 0 : index
    %21 = vector.load %arg4[%c1_14, %c0_15, %c0_16] : memref<3x128x128xbf16, #tpu.memory_space<vmem>>, vector<1x128x128xbf16>
    %22 = vector.shape_cast %21 : vector<1x128x128xbf16> to vector<128x128xbf16>
    %cst_17 = arith.constant dense<0.000000e+00> : vector<16x128xf32>
    %23 = tpu.matmul %20, %22, %cst_17 {dimension_numbers = #tpu.dot_dimension_numbers<[1], [0], [0], [1], [0, 0, 1, 1], [], []>} : vector<16x128xbf16>, vector<128x128xbf16>, vector<16x128xf32> -> vector<16x128xf32>
    %c2 = arith.constant 2 : index
    %c0_18 = arith.constant 0 : index
    %c0_19 = arith.constant 0 : index
    %24 = vector.load %arg3[%c2, %c0_18, %c0_19] : memref<4x1x128xf32, #tpu.memory_space<vmem>>, vector<1x1x128xf32>
    %25 = vector.shape_cast %24 : vector<1x1x128xf32> to vector<1x128xf32>
    %26 = vector.broadcast %25 : vector<1x128xf32> to vector<16x128xf32>
    %27 = arith.addf %23, %26 : vector<16x128xf32>
    %cst_20 = arith.constant 0.000000e+00 : f32
    %28 = vector.broadcast %cst_20 : f32 to vector<16x128xf32>
    %29 = arith.maximumf %27, %28 : vector<16x128xf32>
    %30 = arith.truncf %29 : vector<16x128xf32> to vector<16x128xbf16>
    %c2_21 = arith.constant 2 : index
    %c0_22 = arith.constant 0 : index
    %c0_23 = arith.constant 0 : index
    %31 = vector.load %arg4[%c2_21, %c0_22, %c0_23] : memref<3x128x128xbf16, #tpu.memory_space<vmem>>, vector<1x128x128xbf16>
    %32 = vector.shape_cast %31 : vector<1x128x128xbf16> to vector<128x128xbf16>
    %cst_24 = arith.constant dense<0.000000e+00> : vector<16x128xf32>
    %33 = tpu.matmul %30, %32, %cst_24 {dimension_numbers = #tpu.dot_dimension_numbers<[1], [0], [0], [1], [0, 0, 1, 1], [], []>} : vector<16x128xbf16>, vector<128x128xbf16>, vector<16x128xf32> -> vector<16x128xf32>
    %c3 = arith.constant 3 : index
    %c0_25 = arith.constant 0 : index
    %c0_26 = arith.constant 0 : index
    %34 = vector.load %arg3[%c3, %c0_25, %c0_26] : memref<4x1x128xf32, #tpu.memory_space<vmem>>, vector<1x1x128xf32>
    %35 = vector.shape_cast %34 : vector<1x1x128xf32> to vector<1x128xf32>
    %36 = vector.broadcast %35 : vector<1x128xf32> to vector<16x128xf32>
    %37 = arith.addf %33, %36 : vector<16x128xf32>
    %38 = vector.extract_strided_slice %37 {offsets = [0, 0], sizes = [16, 1], strides = [1, 1]} : vector<16x128xf32> to vector<16x1xf32>
    %c0_27 = arith.constant 0 : index
    %c0_28 = arith.constant 0 : index
    %39 = vector.load %arg5[%c0_27, %c0_28] : memref<16x1xf32, #tpu.memory_space<vmem>>, vector<16x1xf32>
    tpu.vector_store %arg5[%c0_27, %c0_28], %38 {strides = array<i32>} : memref<16x1xf32, #tpu.memory_space<vmem>>, vector<16x1xf32>,
    return
  }
  func.func @transform_0(%arg0: i32) -> (i32, i32) {
    %c0_i32 = arith.constant 0 : i32
    %c0_i32_0 = arith.constant 0 : i32
    return %arg0, %c0_i32 : i32, i32
  }
  func.func @transform_1(%arg0: i32) -> (i32, i32) {
    %c0_i32 = arith.constant 0 : i32
    %c0_i32_0 = arith.constant 0 : i32
    %c0_i32_1 = arith.constant 0 : i32
    return %c0_i32, %c0_i32_0 : i32, i32
  }
  func.func @transform_2(%arg0: i32) -> (i32, i32, i32) {
    %c0_i32 = arith.constant 0 : i32
    %c0_i32_0 = arith.constant 0 : i32
    %c0_i32_1 = arith.constant 0 : i32
    %c0_i32_2 = arith.constant 0 : i32
    return %c0_i32, %c0_i32_0, %c0_i32_1 : i32, i32, i32
  }
  func.func @transform_3(%arg0: i32) -> (i32, i32, i32) {
    %c0_i32 = arith.constant 0 : i32
    %c0_i32_0 = arith.constant 0 : i32
    %c0_i32_1 = arith.constant 0 : i32
    %c0_i32_2 = arith.constant 0 : i32
    return %c0_i32, %c0_i32_0, %c0_i32_1 : i32, i32, i32
  }
  func.func @transform_4(%arg0: i32) -> (i32, i32) {
    %c0_i32 = arith.constant 0 : i32
    %c0_i32_0 = arith.constant 0 : i32
    return %arg0, %c0_i32 : i32, i32
  }
}

</mosaic_0001>

<llo_original>
// kernel: fc_block_pallas.1
$region0: #{fc_block_pallas.1}
  #allocation0 [shape = 'u32[]', space=smem, size = 0x4, offset = 0x4, fixed_abs, tag = 'smem constant byte address 0x4 - core index']
  #allocation1 [shape = 'u32[144,128]{1,0:T(1,128)}', space=vmem, size = 0x12000, scoped, tag = 'internal scratch']
  %s0 = inlined_call_operand.hbm [shape: f32[16,16], index: 0, kind: input, shape index: {}]
  %s1 = inlined_call_operand.hbm [shape: bf16[16,128], index: 1, kind: input, shape index: {}]
  %s2 = inlined_call_operand.vmem [shape: f32[4,1,128], index: 2, kind: input, shape index: {}]
  %s3 = inlined_call_operand.hbm [shape: bf16[3,128,128], index: 3, kind: input, shape index: {}]
  %s4 = inlined_call_operand.vmem [shape: f32[16,1], index: 4, kind: output, shape index: {}]
  %s5 = sld [smem:[#allocation0]]
  $region38: #{fc_block_pallas.1} parent=0
    _
  %s7 = ssub.s32 1, %s5
  %s8 = scalar_select 0, %s7, %s5
  $region1: #{fc_block_pallas.1} parent=0
    #allocation2 [shape = 'u8[8192]{0}', space=vmem, size = 0x2000, scoped, tag = 'input window, operand 0, single buffered']
    #allocation3 [shape = 's32[1]{0}', space=sflag, size = 0x4, scoped, tag = 'scoped memory for fc_block_pallas.1']
    #allocation4 [shape = 'u8[4096]{0}', space=vmem, size = 0x1000, scoped, tag = 'input window, operand 1, single buffered']
    #allocation5 [shape = 's32[1]{0}', space=sflag, size = 0x4, scoped, tag = 'scoped memory for fc_block_pallas.1']
    #allocation6 [shape = 'u8[98304]{0}', space=vmem, size = 0x18000, scoped, tag = 'input window, operand 3, single buffered']
    %9 = vsyncpa [#allocation3], 0
    %10 = vsyncpa [#allocation5], 0
    // Predicated region
    $region2: #{fc_block_pallas.1} parent=1 // pred_check
      _
    $region3: #{fc_block_pallas.1} parent=1 // pred_check_branch
      %12 = sbr.rel (0) target = $region5
    $region4: #{fc_block_pallas.1} parent=1 // pred_region
      %s14 = ssub.s32 256, 256
      %15 = vsyncadd [#allocation3], %s14
      %s16 = sshll.u32 [#allocation2], 4
      %s17 = int_to_ptr.vmem [resolvable:$true] %s16
      %22 = dma.hbm_to_vmem [thread:$0]  %s0, 256, %s17, [#allocation3], 128, 128, 8
    $region5: #{fc_block_pallas.1} parent=1 // pred_fallthru
      _
    // Predicated region
    $region6: #{fc_block_pallas.1} parent=1 // pred_check
      _
    $region7: #{fc_block_pallas.1} parent=1 // pred_check_branch
      %24 = sbr.rel (0) target = $region9
    $region8: #{fc_block_pallas.1} parent=1 // pred_region
      %s26 = ssub.s32 128, 128
      %27 = vsyncadd [#allocation5], %s26
      %s28 = sshll.u32 [#allocation4], 4
      %s29 = int_to_ptr.vmem [resolvable:$true] %s28
      %34 = dma.hbm_to_vmem [thread:$0]  %s1, 128, %s29, [#allocation5], 64, 64, 4
    $region9: #{fc_block_pallas.1} parent=1 // pred_fallthru
      _
    // Predicated region
    $region10: #{fc_block_pallas.1} parent=1 // pred_check
      _
    $region11: #{fc_block_pallas.1} parent=1 // pred_check_branch
      %36 = sbr.rel (0) target = $region13
    $region12: #{fc_block_pallas.1} parent=1 // pred_region
      _
    $region13: #{fc_block_pallas.1} parent=1 // pred_fallthru
      _
    // Predicated region
    $region14: #{fc_block_pallas.1} parent=1 // pred_check
      _
    $region15: #{fc_block_pallas.1} parent=1 // pred_check_branch
      %38 = sbr.rel (0) target = $region17
    $region16: #{fc_block_pallas.1} parent=1 // pred_region
      %s40 = ssub.s32 3072, 3072
      %41 = vsyncadd [#allocation5], %s40
      %s42 = sshll.u32 [#allocation6], 4
      %s43 = int_to_ptr.vmem [resolvable:$true] %s42
      %48 = dma.hbm_to_vmem [thread:$0]  %s3, 3072, %s43, [#allocation5], 64, 64, 4
    $region17: #{fc_block_pallas.1} parent=1 // pred_fallthru
      _
    // Predicated region
    $region18: #{fc_block_pallas.1} parent=1 // pred_check
      _
    $region19: #{fc_block_pallas.1} parent=1 // pred_check_branch
      %50 = sbr.rel (0) target = $region21
    $region20: #{fc_block_pallas.1} parent=1 // pred_region
      %51 = dma.done [#allocation3], 256
    $region21: #{fc_block_pallas.1} parent=1 // pred_fallthru
      _
    // Predicated region
    $region22: #{fc_block_pallas.1} parent=1 // pred_check
      _
    $region23: #{fc_block_pallas.1} parent=1 // pred_check_branch
      %53 = sbr.rel (0) target = $region25
    $region24: #{fc_block_pallas.1} parent=1 // pred_region
      %54 = dma.done [#allocation5], 128
    $region25: #{fc_block_pallas.1} parent=1 // pred_fallthru
      _
    // Predicated region
    $region26: #{fc_block_pallas.1} parent=1 // pred_check
      _
    $region27: #{fc_block_pallas.1} parent=1 // pred_check_branch
      %56 = sbr.rel (0) target = $region29
    $region28: #{fc_block_pallas.1} parent=1 // pred_region
      %57 = dma.done [#allocation5], 3072
    $region29: #{fc_block_pallas.1} parent=1 // pred_fallthru
      _
    %v59 = vld [vmem:[#allocation2] sm:$0xff]
    %v60 = vld [vmem:[#allocation2 + $0x8] sm:$0xff]
    %v61 = vpack.c.bf16 %v60, %v59
    %v62 = vld [vmem:[#allocation4] sm:$0xf]
    %v63 = vld [vmem:[#allocation4 + $0x4] sm:$0xf]
    %v64 = vld [vmem:[%s2] sm:$0x1]
    %v66 = vlaneseq
    %v67 = vshrl.u32 %v66, 7
    %v68 = vsub.s32 0, %v67
    %v69 = vrot.slane %v64, %v68
    %v73 = vunpack.c.l.b16 %v62
    %v74 = vunpack.c.l.b16 %v63
    %v75 = vpack.c.b16 %v74, %v73
    %vm77 = vcmask 130048
    %v79 = vsel %vm77, %v61, 0
    %81 = vmatprep.subr.bf16.mxu0 0
    %82 = vmatpush1.bf16.msra.mxu0 %v75
    %83 = vmatprep.subr.bf16.mxu0 0
    %84 = vmatpush1.bf16.msra.mxu0 0
    %85 = vmatprep.subr.bf16.mxu0 0
    %86 = vmatpush1.bf16.msra.mxu0 0
    %87 = vmatprep.subr.bf16.mxu0 0
    %88 = vmatpush1.bf16.msra.mxu0 0
    %89 = vmatprep.subr.bf16.mxu0 0
    %90 = vmatpush1.bf16.msra.mxu0 0
    %91 = vmatprep.subr.bf16.mxu0 0
    %92 = vmatpush1.bf16.msra.mxu0 0
    %93 = vmatprep.subr.bf16.mxu0 0
    %94 = vmatpush1.bf16.msra.mxu0 0
    %95 = vmatprep.subr.bf16.mxu0 0
    %96 = vmatpush1.bf16.msra.mxu0 0
    %97 = vmatprep.subr.bf16.mxu0 0
    %98 = vmatpush1.bf16.msra.mxu0 0
    %99 = vmatprep.subr.bf16.mxu0 0
    %100 = vmatpush1.bf16.msra.mxu0 0
    %101 = vmatprep.subr.bf16.mxu0 0
    %102 = vmatpush1.bf16.msra.mxu0 0
    %103 = vmatprep.subr.bf16.mxu0 0
    %104 = vmatpush1.bf16.msra.mxu0 0
    %105 = vmatprep.subr.bf16.mxu0 0
    %106 = vmatpush1.bf16.msra.mxu0 0
    %107 = vmatprep.subr.bf16.mxu0 0
    %108 = vmatpush1.bf16.msra.mxu0 0
    %109 = vmatprep.subr.bf16.mxu0 0
    %110 = vmatpush1.bf16.msra.mxu0 0
    %111 = vmatprep.subr.bf16.mxu0 0
    %112 = vmatpush1.bf16.msra.mxu0 0
    %113 = vmatprep.mubr.bf16.mxu0 0
    %114 = vmatmul.mubr.bf16.gmra.mrb[0].mxu0 %v79
    %v115 = vpop.f32.mrb[0].mxu0
    %v116 = vadd.f32 %v69, %v115
    %v117 = vpop.f32.mrb[0].mxu0
    %v118 = vpop.f32.mrb[0].mxu0
    %v119 = vadd.f32 %v69, %v118
    %v120 = vpop.f32.mrb[0].mxu0
    %121 = vdwg.mxu0
    %v122 = vmax.f32 %v116, 0.0
    %v123 = vmax.f32 %v119, 0.0
    %v124 = vpack.c.bf16 %v123, %v122
    %v125 = vld [vmem:[#allocation6] sm:$0xf]
    %v126 = vld [vmem:[#allocation6 + $0x4] sm:$0xf]
    %v127 = vld [vmem:[#allocation6 + $0x8] sm:$0xf]
    %v128 = vld [vmem:[#allocation6 + $0xc] sm:$0xf]
    %v129 = vld [vmem:[#allocation6 + $0x10] sm:$0xf]
    %v130 = vld [vmem:[#allocation6 + $0x14] sm:$0xf]
    %v131 = vld [vmem:[#allocation6 + $0x18] sm:$0xf]
    %v132 = vld [vmem:[#allocation6 + $0x1c] sm:$0xf]
    %v133 = vld [vmem:[#allocation6 + $0x20] sm:$0xf]
    %v134 = vld [vmem:[#allocation6 + $0x24] sm:$0xf]
    %v135 = vld [vmem:[#allocation6 + $0x28] sm:$0xf]
    %v136 = vld [vmem:[#allocation6 + $0x2c] sm:$0xf]
    %v137 = vld [vmem:[#allocation6 + $0x30] sm:$0xf]
    %v138 = vld [vmem:[#allocation6 + $0x34] sm:$0xf]
    %v139 = vld [vmem:[#allocation6 + $0x38] sm:$0xf]
    %v140 = vld [vmem:[#allocation6 + $0x3c] sm:$0xf]
    %s141 = scalar_lea.vmem %s2, 1
    %v142 = vld [vmem:[%s141] sm:$0x1]
    %v144 = vlaneseq
    %v145 = vshrl.u32 %v144, 7
    %v146 = vsub.s32 0, %v145
    %v147 = vrot.slane %v142, %v146
    %v165 = vunpack.c.l.b16 %v125
    %v166 = vunpack.c.l.b16 %v126
    %v167 = vunpack.c.l.b16 %v127
    %v168 = vunpack.c.l.b16 %v128
    %v169 = vunpack.c.l.b16 %v129
    %v170 = vunpack.c.l.b16 %v130
    %v171 = vunpack.c.l.b16 %v131
    %v172 = vunpack.c.l.b16 %v132
    %v173 = vunpack.c.l.b16 %v133
    %v174 = vunpack.c.l.b16 %v134
    %v175 = vunpack.c.l.b16 %v135
    %v176 = vunpack.c.l.b16 %v136
    %v177 = vunpack.c.l.b16 %v137
    %v178 = vunpack.c.l.b16 %v138
    %v179 = vunpack.c.l.b16 %v139
    %v180 = vunpack.c.l.b16 %v140
    %v181 = vpack.c.b16 %v166, %v165
    %v182 = vpack.c.b16 %v168, %v167
    %v183 = vpack.c.b16 %v170, %v169
    %v184 = vpack.c.b16 %v172, %v171
    %v185 = vpack.c.b16 %v174, %v173
    %v186 = vpack.c.b16 %v176, %v175
    %v187 = vpack.c.b16 %v178, %v177
    %v188 = vpack.c.b16 %v180, %v179
    %197 = vmatprep.subr.bf16.mxu0 0
    %198 = vmatpush1.bf16.msra.mxu0 %v181
    %199 = vmatprep.subr.bf16.mxu0 0
    %200 = vmatpush1.bf16.msra.mxu0 %v182
    %201 = vmatprep.subr.bf16.mxu0 0
    %202 = vmatpush1.bf16.msra.mxu0 %v183
    %203 = vmatprep.subr.bf16.mxu0 0
    %204 = vmatpush1.bf16.msra.mxu0 %v184
    %205 = vmatprep.subr.bf16.mxu0 0
    %206 = vmatpush1.bf16.msra.mxu0 %v185
    %207 = vmatprep.subr.bf16.mxu0 0
    %208 = vmatpush1.bf16.msra.mxu0 %v186
    %209 = vmatprep.subr.bf16.mxu0 0
    %210 = vmatpush1.bf16.msra.mxu0 %v187
    %211 = vmatprep.subr.bf16.mxu0 0
    %212 = vmatpush1.bf16.msra.mxu0 %v188
    %213 = vmatprep.subr.bf16.mxu0 0
    %214 = vmatpush1.bf16.msra.mxu0 0
    %215 = vmatprep.subr.bf16.mxu0 0
    %216 = vmatpush1.bf16.msra.mxu0 0
    %217 = vmatprep.subr.bf16.mxu0 0
    %218 = vmatpush1.bf16.msra.mxu0 0
    %219 = vmatprep.subr.bf16.mxu0 0
    %220 = vmatpush1.bf16.msra.mxu0 0
    %221 = vmatprep.subr.bf16.mxu0 0
    %222 = vmatpush1.bf16.msra.mxu0 0
    %223 = vmatprep.subr.bf16.mxu0 0
    %224 = vmatpush1.bf16.msra.mxu0 0
    %225 = vmatprep.subr.bf16.mxu0 0
    %226 = vmatpush1.bf16.msra.mxu0 0
    %227 = vmatprep.subr.bf16.mxu0 0
    %228 = vmatpush1.bf16.msra.mxu0 0
    %229 = vmatprep.mubr.bf16.mxu0 0
    %230 = vmatmul.mubr.bf16.gmra.mrb[0].mxu0 %v124
    %v231 = vpop.f32.mrb[0].mxu0
    %v232 = vadd.f32 %v147, %v231
    %v233 = vpop.f32.mrb[0].mxu0
    %v234 = vpop.f32.mrb[0].mxu0
    %v235 = vadd.f32 %v147, %v234
    %v236 = vpop.f32.mrb[0].mxu0
    %237 = vdwg.mxu0
    %v238 = vmax.f32 %v232, 0.0
    %v239 = vmax.f32 %v235, 0.0
    %v240 = vpack.c.bf16 %v239, %v238
    %s241 = scalar_lea.vmem [#allocation6], 64
    %v242 = vld [vmem:[%s241] sm:$0xf]
    %v243 = vld [vmem:[%s241 + $0x4] sm:$0xf]
    %v244 = vld [vmem:[%s241 + $0x8] sm:$0xf]
    %v245 = vld [vmem:[%s241 + $0xc] sm:$0xf]
    %v246 = vld [vmem:[%s241 + $0x10] sm:$0xf]
    %v247 = vld [vmem:[%s241 + $0x14] sm:$0xf]
    %v248 = vld [vmem:[%s241 + $0x18] sm:$0xf]
    %v249 = vld [vmem:[%s241 + $0x1c] sm:$0xf]
    %v250 = vld [vmem:[%s241 + $0x20] sm:$0xf]
    %v251 = vld [vmem:[%s241 + $0x24] sm:$0xf]
    %v252 = vld [vmem:[%s241 + $0x28] sm:$0xf]
    %v253 = vld [vmem:[%s241 + $0x2c] sm:$0xf]
    %v254 = vld [vmem:[%s241 + $0x30] sm:$0xf]
    %v255 = vld [vmem:[%s241 + $0x34] sm:$0xf]
    %v256 = vld [vmem:[%s241 + $0x38] sm:$0xf]
    %v257 = vld [vmem:[%s241 + $0x3c] sm:$0xf]
    %s258 = scalar_lea.vmem %s2, 2
    %v259 = vld [vmem:[%s258] sm:$0x1]
    %v261 = vlaneseq
    %v262 = vshrl.u32 %v261, 7
    %v263 = vsub.s32 0, %v262
    %v264 = vrot.slane %v259, %v263
    %v282 = vunpack.c.l.b16 %v242
    %v283 = vunpack.c.l.b16 %v243
    %v284 = vunpack.c.l.b16 %v244
    %v285 = vunpack.c.l.b16 %v245
    %v286 = vunpack.c.l.b16 %v246
    %v287 = vunpack.c.l.b16 %v247
    %v288 = vunpack.c.l.b16 %v248
    %v289 = vunpack.c.l.b16 %v249
    %v290 = vunpack.c.l.b16 %v250
    %v291 = vunpack.c.l.b16 %v251
    %v292 = vunpack.c.l.b16 %v252
    %v293 = vunpack.c.l.b16 %v253
    %v294 = vunpack.c.l.b16 %v254
    %v295 = vunpack.c.l.b16 %v255
    %v296 = vunpack.c.l.b16 %v256
    %v297 = vunpack.c.l.b16 %v257
    %v298 = vpack.c.b16 %v283, %v282
    %v299 = vpack.c.b16 %v285, %v284
    %v300 = vpack.c.b16 %v287, %v286
    %v301 = vpack.c.b16 %v289, %v288
    %v302 = vpack.c.b16 %v291, %v290
    %v303 = vpack.c.b16 %v293, %v292
    %v304 = vpack.c.b16 %v295, %v294
    %v305 = vpack.c.b16 %v297, %v296
    %314 = vmatprep.subr.bf16.mxu0 0
    %315 = vmatpush1.bf16.msra.mxu0 %v298
    %316 = vmatprep.subr.bf16.mxu0 0
    %317 = vmatpush1.bf16.msra.mxu0 %v299
    %318 = vmatprep.subr.bf16.mxu0 0
    %319 = vmatpush1.bf16.msra.mxu0 %v300
    %320 = vmatprep.subr.bf16.mxu0 0
    %321 = vmatpush1.bf16.msra.mxu0 %v301
    %322 = vmatprep.subr.bf16.mxu0 0
    %323 = vmatpush1.bf16.msra.mxu0 %v302
    %324 = vmatprep.subr.bf16.mxu0 0
    %325 = vmatpush1.bf16.msra.mxu0 %v303
    %326 = vmatprep.subr.bf16.mxu0 0
    %327 = vmatpush1.bf16.msra.mxu0 %v304
    %328 = vmatprep.subr.bf16.mxu0 0
    %329 = vmatpush1.bf16.msra.mxu0 %v305
    %330 = vmatprep.subr.bf16.mxu0 0
    %331 = vmatpush1.bf16.msra.mxu0 0
    %332 = vmatprep.subr.bf16.mxu0 0
    %333 = vmatpush1.bf16.msra.mxu0 0
    %334 = vmatprep.subr.bf16.mxu0 0
    %335 = vmatpush1.bf16.msra.mxu0 0
    %336 = vmatprep.subr.bf16.mxu0 0
    %337 = vmatpush1.bf16.msra.mxu0 0
    %338 = vmatprep.subr.bf16.mxu0 0
    %339 = vmatpush1.bf16.msra.mxu0 0
    %340 = vmatprep.subr.bf16.mxu0 0
    %341 = vmatpush1.bf16.msra.mxu0 0
    %342 = vmatprep.subr.bf16.mxu0 0
    %343 = vmatpush1.bf16.msra.mxu0 0
    %344 = vmatprep.subr.bf16.mxu0 0
    %345 = vmatpush1.bf16.msra.mxu0 0
    %346 = vmatprep.mubr.bf16.mxu0 0
    %347 = vmatmul.mubr.bf16.gmra.mrb[0].mxu0 %v240
    %v348 = vpop.f32.mrb[0].mxu0
    %v349 = vadd.f32 %v264, %v348
    %v350 = vpop.f32.mrb[0].mxu0
    %v351 = vpop.f32.mrb[0].mxu0
    %v352 = vadd.f32 %v264, %v351
    %v353 = vpop.f32.mrb[0].mxu0
    %354 = vdwg.mxu0
    %v355 = vmax.f32 %v349, 0.0
    %v356 = vmax.f32 %v352, 0.0
    %v357 = vpack.c.bf16 %v356, %v355
    %s358 = scalar_lea.vmem [#allocation6], 128
    %v359 = vld [vmem:[%s358] sm:$0xf]
    %v360 = vld [vmem:[%s358 + $0x4] sm:$0xf]
    %v361 = vld [vmem:[%s358 + $0x8] sm:$0xf]
    %v362 = vld [vmem:[%s358 + $0xc] sm:$0xf]
    %v363 = vld [vmem:[%s358 + $0x10] sm:$0xf]
    %v364 = vld [vmem:[%s358 + $0x14] sm:$0xf]
    %v365 = vld [vmem:[%s358 + $0x18] sm:$0xf]
    %v366 = vld [vmem:[%s358 + $0x1c] sm:$0xf]
    %v367 = vld [vmem:[%s358 + $0x20] sm:$0xf]
    %v368 = vld [vmem:[%s358 + $0x24] sm:$0xf]
    %v369 = vld [vmem:[%s358 + $0x28] sm:$0xf]
    %v370 = vld [vmem:[%s358 + $0x2c] sm:$0xf]
    %v371 = vld [vmem:[%s358 + $0x30] sm:$0xf]
    %v372 = vld [vmem:[%s358 + $0x34] sm:$0xf]
    %v373 = vld [vmem:[%s358 + $0x38] sm:$0xf]
    %v374 = vld [vmem:[%s358 + $0x3c] sm:$0xf]
    %s375 = scalar_lea.vmem %s2, 3
    %v376 = vld [vmem:[%s375] sm:$0x1]
    %v378 = vlaneseq
    %v379 = vshrl.u32 %v378, 7
    %v380 = vsub.s32 0, %v379
    %v381 = vrot.slane %v376, %v380
    %v399 = vunpack.c.l.b16 %v359
    %v400 = vunpack.c.l.b16 %v360
    %v401 = vunpack.c.l.b16 %v361
    %v402 = vunpack.c.l.b16 %v362
    %v403 = vunpack.c.l.b16 %v363
    %v404 = vunpack.c.l.b16 %v364
    %v405 = vunpack.c.l.b16 %v365
    %v406 = vunpack.c.l.b16 %v366
    %v407 = vunpack.c.l.b16 %v367
    %v408 = vunpack.c.l.b16 %v368
    %v409 = vunpack.c.l.b16 %v369
    %v410 = vunpack.c.l.b16 %v370
    %v411 = vunpack.c.l.b16 %v371
    %v412 = vunpack.c.l.b16 %v372
    %v413 = vunpack.c.l.b16 %v373
    %v414 = vunpack.c.l.b16 %v374
    %v415 = vpack.c.b16 %v400, %v399
    %v416 = vpack.c.b16 %v402, %v401
    %v417 = vpack.c.b16 %v404, %v403
    %v418 = vpack.c.b16 %v406, %v405
    %v419 = vpack.c.b16 %v408, %v407
    %v420 = vpack.c.b16 %v410, %v409
    %v421 = vpack.c.b16 %v412, %v411
    %v422 = vpack.c.b16 %v414, %v413
    %431 = vmatprep.subr.bf16.mxu0 0
    %432 = vmatpush1.bf16.msra.mxu0 %v415
    %433 = vmatprep.subr.bf16.mxu0 0
    %434 = vmatpush1.bf16.msra.mxu0 %v416
    %435 = vmatprep.subr.bf16.mxu0 0
    %436 = vmatpush1.bf16.msra.mxu0 %v417
    %437 = vmatprep.subr.bf16.mxu0 0
    %438 = vmatpush1.bf16.msra.mxu0 %v418
    %439 = vmatprep.subr.bf16.mxu0 0
    %440 = vmatpush1.bf16.msra.mxu0 %v419
    %441 = vmatprep.subr.bf16.mxu0 0
    %442 = vmatpush1.bf16.msra.mxu0 %v420
    %443 = vmatprep.subr.bf16.mxu0 0
    %444 = vmatpush1.bf16.msra.mxu0 %v421
    %445 = vmatprep.subr.bf16.mxu0 0
    %446 = vmatpush1.bf16.msra.mxu0 %v422
    %447 = vmatprep.subr.bf16.mxu0 0
    %448 = vmatpush1.bf16.msra.mxu0 0
    %449 = vmatprep.subr.bf16.mxu0 0
    %450 = vmatpush1.bf16.msra.mxu0 0
    %451 = vmatprep.subr.bf16.mxu0 0
    %452 = vmatpush1.bf16.msra.mxu0 0
    %453 = vmatprep.subr.bf16.mxu0 0
    %454 = vmatpush1.bf16.msra.mxu0 0
    %455 = vmatprep.subr.bf16.mxu0 0
    %456 = vmatpush1.bf16.msra.mxu0 0
    %457 = vmatprep.subr.bf16.mxu0 0
    %458 = vmatpush1.bf16.msra.mxu0 0
    %459 = vmatprep.subr.bf16.mxu0 0
    %460 = vmatpush1.bf16.msra.mxu0 0
    %461 = vmatprep.subr.bf16.mxu0 0
    %462 = vmatpush1.bf16.msra.mxu0 0
    %463 = vmatprep.mubr.bf16.mxu0 0
    %464 = vmatmul.mubr.bf16.gmra.mrb[0].mxu0 %v357
    %v465 = vpop.f32.mrb[0].mxu0
    %v466 = vadd.f32 %v381, %v465
    %v467 = vpop.f32.mrb[0].mxu0
    %v468 = vpop.f32.mrb[0].mxu0
    %v469 = vadd.f32 %v381, %v468
    %v470 = vpop.f32.mrb[0].mxu0
    %471 = vdwg.mxu0
    %vm472 = vcmask 7168
    %473 = vst.msk [vmem:[%s4] sm:$0xff] %vm472, %v466
    %474 = vst.msk [vmem:[%s4 + $0x8] sm:$0xff] %vm472, %v469
    // Predicated region
    $region30: #{fc_block_pallas.1} parent=1 // pred_check
      _
    $region31: #{fc_block_pallas.1} parent=1 // pred_check_branch
      %476 = sbr.rel (0) target = $region33
    $region32: #{fc_block_pallas.1} parent=1 // pred_region
      _
    $region33: #{fc_block_pallas.1} parent=1 // pred_fallthru
      _
    // Predicated region
    $region34: #{fc_block_pallas.1} parent=1 // pred_check
      _
    $region35: #{fc_block_pallas.1} parent=1 // pred_check_branch
      %478 = sbr.rel (0) target = $region37
    $region36: #{fc_block_pallas.1} parent=1 // pred_region
      _
    $region37: #{fc_block_pallas.1} parent=1 // pred_fallthru
      _
    %479 = vsyncpa [#allocation3], 1
    %480 = vsyncpa [#allocation5], 1

</llo_original>
